<compile_context>
chip_gen: v6e
topology: v6e:2x2x1
jax: 0.10.0
libtpu: 0.0.40
codegen_flags: <defaults>
</compile_context>

<pallas_src>
import functools

import jax
import jax.numpy as jnp
import numpy as np
from jax import lax
from jax.experimental import pallas as pl
from jax.experimental.pallas import tpu as pltpu


def _mlp_kernel(x_ref, w1_ref, s1_ref, b1_ref, w2_ref, s2_ref, b2_ref,
                w3_ref, b3_ref, o_ref, *, lane_chunk):
    """One grid step: o[nb,:,tl] = W3 @ relu(s2*(W2 @ relu(s1*(W1@x)+b1))+b2) + b3."""
    nb, _, tl = x_ref.shape
    n_chunks = tl // lane_chunk
    cdt = w1_ref.dtype                          # bf16 inputs for the MXU

    w1 = w1_ref[...]
    w2 = w2_ref[...]
    w3 = w3_ref[...]
    s1 = s1_ref[...]
    b1 = b1_ref[...]
    s2 = s2_ref[...]
    b2 = b2_ref[...]
    b3 = b3_ref[...]

    def compute(n, l0):
        x = x_ref[n, :, pl.ds(l0, lane_chunk)].astype(cdt)
        h1 = jnp.dot(w1, x, preferred_element_type=jnp.float32)
        h1 = jnp.maximum(h1 * s1 + b1, 0.0)     # f32 BN scale+shift, ReLU (VPU)
        h2 = jnp.dot(w2, h1.astype(cdt), preferred_element_type=jnp.float32)
        h2 = jnp.maximum(h2 * s2 + b2, 0.0)
        out = jnp.dot(w3, h2.astype(cdt), preferred_element_type=jnp.float32)
        o_ref[n, :, pl.ds(l0, lane_chunk)] = (out + b3).astype(o_ref.dtype)

    total = nb * n_chunks
    if total == 1:
        compute(0, 0)
    else:
        def body(i, carry):
            n = i // n_chunks
            l0 = pl.multiple_of((i % n_chunks) * lane_chunk, lane_chunk)
            compute(n, l0)
            return carry
        lax.fori_loop(0, total, body, 0, unroll=(total <= 8))


def _choose_tiles(N, L, C_in, C_out, x_itemsize, out_itemsize):
    """Pick (Nb, tl, lane_chunk) so each step streams ~2 MiB and grid >= 2."""
    cap = 8192
    tl = L if L <= cap else cap                 # full L, or big multiple of 128

    if tl <= 1024:
        lane_chunk = tl
    else:
        lane_chunk = tl
        for c in (1024, 512, 256, 128):
            if tl % c == 0:
                lane_chunk = c
                break

    bytes_per_pos = C_in * x_itemsize + C_out * out_itemsize
    target = 2 << 20                            # ~2 MiB of x+out per grid step
    nb = max(1, min(N, target // max(1, tl * bytes_per_pos)))

    def n_steps(nb_, tl_):
        return pl.cdiv(N, nb_) * pl.cdiv(L, tl_)

    # Keep at least 2 grid steps so both v7x TensorCores get work.
    while nb > 1 and n_steps(nb, tl) < 2:
        nb = max(1, nb // 2)
    if n_steps(nb, tl) < 2 and L > 128:
        tl = min(tl, ((L + 1) // 2 + 127) // 128 * 128)
        lane_chunk = min(lane_chunk, tl)
        if tl % lane_chunk != 0:
            lane_chunk = tl
    return nb, tl, lane_chunk


def generic_mlp_forward(x_ncl, params, *, compute_dtype=jnp.bfloat16,
                        out_dtype=None, tl=None, nb=None):
    """x_ncl: (N, C_in, L) -- same NCL layout as torch Conv1d input/output."""
    N, C_in, L = x_ncl.shape
    w1, g1, be1, rm1, rv1, w2, g2, be2, rm2, rv2, w3, b3 = params
    H1, H2, C_out = w1.shape[0], w2.shape[0], w3.shape[0]
    eps = 1e-5
    out_dtype = x_ncl.dtype if out_dtype is None else out_dtype

    # Eval-mode BN as per-row scale s and shift b, applied in f32 post-matmul.
    s1 = g1 / jnp.sqrt(rv1 + eps)
    s2 = g2 / jnp.sqrt(rv2 + eps)
    w1m = w1[:, :, 0].astype(compute_dtype)                    # (H1, C_in)
    w2m = w2[:, :, 0].astype(compute_dtype)                    # (H2, H1)
    w3m = w3[:, :, 0].astype(compute_dtype)                    # (C_out, H2)
    s1c = s1.reshape(H1, 1).astype(jnp.float32)
    sh1 = (be1 - rm1 * s1).reshape(H1, 1).astype(jnp.float32)
    s2c = s2.reshape(H2, 1).astype(jnp.float32)
    sh2 = (be2 - rm2 * s2).reshape(H2, 1).astype(jnp.float32)
    b3c = b3.reshape(C_out, 1).astype(jnp.float32)

    x_isz = x_ncl.dtype.itemsize
    o_isz = jnp.dtype(out_dtype).itemsize
    nb_a, tl_a, lane_chunk = _choose_tiles(N, L, C_in, C_out, x_isz, o_isz)
    if tl is None:
        tl = tl_a
    if nb is None:
        nb = nb_a
    if tl % lane_chunk != 0 or lane_chunk > tl:
        lane_chunk = tl

    grid = (pl.cdiv(N, nb), pl.cdiv(L, tl))

    x_spec = pl.BlockSpec((nb, C_in, tl), lambda i, j: (i, 0, j))
    o_spec = pl.BlockSpec((nb, C_out, tl), lambda i, j: (i, 0, j))
    resident = lambda a, b: pl.BlockSpec((a, b), lambda i, j: (0, 0))

    # Cost hint for the XLA scheduler.
    M = N * L
    flops = 2 * M * (C_in * H1 + H1 * H2 + H2 * C_out)
    wbytes = ((w1m.size + w2m.size + w3m.size) * jnp.dtype(compute_dtype).itemsize
              + (s1c.size + sh1.size + s2c.size + sh2.size + b3c.size) * 4)
    bytes_accessed = int(x_ncl.size * x_isz + M * C_out * o_isz + wbytes)

    # VMEM budget: double-buffered x/out blocks + resident weights + f32
    # intermediates of one lane chunk.  Only raise the limit when needed
    # (v7x physical VMEM is 64 MiB; default scoped limit is 16-32 MiB).
    block_bytes = 2 * nb * tl * (C_in * x_isz + C_out * o_isz)
    scratch_bytes = 2 * (H1 + H2 + C_out) * lane_chunk * 4
    vmem_est = block_bytes + 2 * wbytes + scratch_bytes
    vmem_limit = None
    if vmem_est > (16 << 20):
        vmem_limit = int(min(max(2 * vmem_est, 32 << 20), 48 << 20))

    kernel = functools.partial(_mlp_kernel, lane_chunk=lane_chunk)

    return pl.pallas_call(
        kernel,
        out_shape=jax.ShapeDtypeStruct((N, C_out, L), out_dtype),
        grid=grid,
        in_specs=[
            x_spec,
            resident(H1, C_in), resident(H1, 1), resident(H1, 1),
            resident(H2, H1), resident(H2, 1), resident(H2, 1),
            resident(C_out, H2), resident(C_out, 1),
        ],
        out_specs=o_spec,
        compiler_params=pltpu.CompilerParams(
            dimension_semantics=("parallel", "parallel"),
            vmem_limit_bytes=vmem_limit),
        cost_estimate=pl.CostEstimate(
            flops=flops, transcendentals=0, bytes_accessed=bytes_accessed),
    )(x_ncl, w1m, s1c, sh1, w2m, s2c, sh2, w3m, b3c)


def _reference(x_ncl, params):
    """Pure-JAX f32 reference of the same forward (eval-mode BN)."""
    w1, g1, be1, rm1, rv1, w2, g2, be2, rm2, rv2, w3, b3 = params
    eps = 1e-5
    x = jnp.transpose(x_ncl, (0, 2, 1))                      # (N, L, C_in)
    h = jnp.einsum('nlc,hc->nlh', x, w1[:, :, 0])
    h = (h - rm1) / jnp.sqrt(rv1 + eps) * g1 + be1
    h = jnp.maximum(h, 0.0)
    h = jnp.einsum('nlc,hc->nlh', h, w2[:, :, 0])
    h = (h - rm2) / jnp.sqrt(rv2 + eps) * g2 + be2
    h = jnp.maximum(h, 0.0)
    o = jnp.einsum('nlc,oc->nlo', h, w3[:, :, 0]) + b3
    return jnp.transpose(o, (0, 2, 1))


def _init_params(key, c_in, h1, h2, c_out):
    """Deterministic parameter init (mimics torch Conv1d default ranges)."""
    ks = jax.random.split(key, 12)

    def conv_w(k, out_c, in_c):
        bound = 1.0 / np.sqrt(in_c)
        return jax.random.uniform(k, (out_c, in_c, 1), jnp.float32, -bound, bound)

    w1 = conv_w(ks[0], h1, c_in)
    w2 = conv_w(ks[1], h2, h1)
    w3 = conv_w(ks[2], c_out, h2)
    b3 = jax.random.uniform(ks[3], (c_out,), jnp.float32,
                            -1.0 / np.sqrt(h2), 1.0 / np.sqrt(h2))
    g1 = 1.0 + 0.1 * jax.random.normal(ks[4], (h1,), jnp.float32)
    be1 = 0.1 * jax.random.normal(ks[5], (h1,), jnp.float32)
    rm1 = 0.05 * jax.random.normal(ks[6], (h1,), jnp.float32)
    rv1 = 1.0 + 0.1 * jax.random.uniform(ks[7], (h1,), jnp.float32)
    g2 = 1.0 + 0.1 * jax.random.normal(ks[8], (h2,), jnp.float32)
    be2 = 0.1 * jax.random.normal(ks[9], (h2,), jnp.float32)
    rm2 = 0.05 * jax.random.normal(ks[10], (h2,), jnp.float32)
    rv2 = 1.0 + 0.1 * jax.random.uniform(ks[11], (h2,), jnp.float32)
    return (w1, g1, be1, rm1, rv1, w2, g2, be2, rm2, rv2, w3, b3)


if __name__ == "__main__":
    key = jax.random.PRNGKey(0)
    k_x, k_p = jax.random.split(key)

    N, C_IN, L = 2, 16, 256       # Conv1d NCL input (L = num proposals/queries)
    H1, H2, C_OUT = 32, 32, 8     # hidden_dims=[32, 32], output_dim=8

    x = jax.random.normal(k_x, (N, C_IN, L), jnp.float32)
    params = _init_params(k_p, C_IN, H1, H2, C_OUT)

    out = jax.block_until_ready(generic_mlp_forward(x, params))

    ref = _reference(x, params)
    # bf16 MXU matmuls with f32 accumulation and f32 BN scale/shift vs a pure
    # f32 reference over a 3-layer chain.
    np.testing.assert_allclose(np.asarray(out), np.asarray(ref),
                               rtol=5e-2, atol=5e-2)
    print("KERNEL_OK")
</pallas_src>

<mosaic_0001>
module attributes {stable_mosaic.version = 11 : i64} {
  func.func @_mlp_kernel(%arg0: i32, %arg1: i32, %arg2: memref<1x16x256xf32, #tpu.memory_space<vmem>>, %arg3: memref<32x16xbf16, #tpu.memory_space<vmem>>, %arg4: memref<32x1xf32, #tpu.memory_space<vmem>>, %arg5: memref<32x1xf32, #tpu.memory_space<vmem>>, %arg6: memref<32x32xbf16, #tpu.memory_space<vmem>>, %arg7: memref<32x1xf32, #tpu.memory_space<vmem>>, %arg8: memref<32x1xf32, #tpu.memory_space<vmem>>, %arg9: memref<8x32xbf16, #tpu.memory_space<vmem>>, %arg10: memref<8x1xf32, #tpu.memory_space<vmem>>, %arg11: memref<1x8x256xf32, #tpu.memory_space<vmem>>) attributes {dimension_semantics = [#tpu.dimension_semantics<parallel>, #tpu.dimension_semantics<parallel>], iteration_bounds = array<i64: 2, 1>, scalar_prefetch = 0 : i64, scratch_operands = 0 : i64, tpu.core_type = #tpu.core_type<tc>, window_params = [{transform_indices = @transform_0, window_bounds = array<i64: 1, 16, 256>}, {pipeline_mode = #tpu.pipeline_mode<synchronous>, transform_indices = @transform_1, window_bounds = array<i64: 32, 16>}, {pipeline_mode = #tpu.pipeline_mode<synchronous>, transform_indices = @transform_2, window_bounds = array<i64: 32, 1>}, {pipeline_mode = #tpu.pipeline_mode<synchronous>, transform_indices = @transform_3, window_bounds = array<i64: 32, 1>}, {pipeline_mode = #tpu.pipeline_mode<synchronous>, transform_indices = @transform_4, window_bounds = array<i64: 32, 32>}, {pipeline_mode = #tpu.pipeline_mode<synchronous>, transform_indices = @transform_5, window_bounds = array<i64: 32, 1>}, {pipeline_mode = #tpu.pipeline_mode<synchronous>, transform_indices = @transform_6, window_bounds = array<i64: 32, 1>}, {pipeline_mode = #tpu.pipeline_mode<synchronous>, transform_indices = @transform_7, window_bounds = array<i64: 8, 32>}, {pipeline_mode = #tpu.pipeline_mode<synchronous>, transform_indices = @transform_8, window_bounds = array<i64: 8, 1>}, {transform_indices = @transform_9, window_bounds = array<i64: 1, 8, 256>}]} {
    %c0 = arith.constant 0 : index
    %c0_0 = arith.constant 0 : index
    %0 = vector.load %arg3[%c0, %c0_0] : memref<32x16xbf16, #tpu.memory_space<vmem>>, vector<32x16xbf16>
    %c0_1 = arith.constant 0 : index
    %c0_2 = arith.constant 0 : index
    %1 = vector.load %arg6[%c0_1, %c0_2] : memref<32x32xbf16, #tpu.memory_space<vmem>>, vector<32x32xbf16>
    %c0_3 = arith.constant 0 : index
    %c0_4 = arith.constant 0 : index
    %2 = vector.load %arg9[%c0_3, %c0_4] : memref<8x32xbf16, #tpu.memory_space<vmem>>, vector<8x32xbf16>
    %c0_5 = arith.constant 0 : index
    %c0_6 = arith.constant 0 : index
    %3 = vector.load %arg4[%c0_5, %c0_6] : memref<32x1xf32, #tpu.memory_space<vmem>>, vector<32x1xf32>
    %c0_7 = arith.constant 0 : index
    %c0_8 = arith.constant 0 : index
    %4 = vector.load %arg5[%c0_7, %c0_8] : memref<32x1xf32, #tpu.memory_space<vmem>>, vector<32x1xf32>
    %c0_9 = arith.constant 0 : index
    %c0_10 = arith.constant 0 : index
    %5 = vector.load %arg7[%c0_9, %c0_10] : memref<32x1xf32, #tpu.memory_space<vmem>>, vector<32x1xf32>
    %c0_11 = arith.constant 0 : index
    %c0_12 = arith.constant 0 : index
    %6 = vector.load %arg8[%c0_11, %c0_12] : memref<32x1xf32, #tpu.memory_space<vmem>>, vector<32x1xf32>
    %c0_13 = arith.constant 0 : index
    %c0_14 = arith.constant 0 : index
    %7 = vector.load %arg10[%c0_13, %c0_14] : memref<8x1xf32, #tpu.memory_space<vmem>>, vector<8x1xf32>
    %c0_15 = arith.constant 0 : index
    %c0_16 = arith.constant 0 : index
    %c0_17 = arith.constant 0 : index
    %8 = vector.load %arg2[%c0_15, %c0_16, %c0_17] : memref<1x16x256xf32, #tpu.memory_space<vmem>>, vector<1x16x256xf32>
    %9 = vector.shape_cast %8 : vector<1x16x256xf32> to vector<16x256xf32>
    %10 = arith.truncf %9 : vector<16x256xf32> to vector<16x256xbf16>
    %cst = arith.constant dense<0.000000e+00> : vector<32x256xf32>
    %11 = tpu.matmul %0, %10, %cst {dimension_numbers = #tpu.dot_dimension_numbers<[1], [0], [0], [1], [0, 0, 1, 1], [], []>} : vector<32x16xbf16>, vector<16x256xbf16>, vector<32x256xf32> -> vector<32x256xf32>
    %12 = vector.broadcast %3 : vector<32x1xf32> to vector<32x256xf32>
    %13 = arith.mulf %11, %12 : vector<32x256xf32>
    %14 = vector.broadcast %4 : vector<32x1xf32> to vector<32x256xf32>
    %15 = arith.addf %13, %14 : vector<32x256xf32>
    %cst_18 = arith.constant 0.000000e+00 : f32
    %16 = vector.broadcast %cst_18 : f32 to vector<32x256xf32>
    %17 = arith.maximumf %15, %16 : vector<32x256xf32>
    %18 = arith.truncf %17 : vector<32x256xf32> to vector<32x256xbf16>
    %cst_19 = arith.constant dense<0.000000e+00> : vector<32x256xf32>
    %19 = tpu.matmul %1, %18, %cst_19 {dimension_numbers = #tpu.dot_dimension_numbers<[1], [0], [0], [1], [0, 0, 1, 1], [], []>} : vector<32x32xbf16>, vector<32x256xbf16>, vector<32x256xf32> -> vector<32x256xf32>
    %20 = vector.broadcast %5 : vector<32x1xf32> to vector<32x256xf32>
    %21 = arith.mulf %19, %20 : vector<32x256xf32>
    %22 = vector.broadcast %6 : vector<32x1xf32> to vector<32x256xf32>
    %23 = arith.addf %21, %22 : vector<32x256xf32>
    %cst_20 = arith.constant 0.000000e+00 : f32
    %24 = vector.broadcast %cst_20 : f32 to vector<32x256xf32>
    %25 = arith.maximumf %23, %24 : vector<32x256xf32>
    %26 = arith.truncf %25 : vector<32x256xf32> to vector<32x256xbf16>
    %cst_21 = arith.constant dense<0.000000e+00> : vector<8x256xf32>
    %27 = tpu.matmul %2, %26, %cst_21 {dimension_numbers = #tpu.dot_dimension_numbers<[1], [0], [0], [1], [0, 0, 1, 1], [], []>} : vector<8x32xbf16>, vector<32x256xbf16>, vector<8x256xf32> -> vector<8x256xf32>
    %28 = vector.broadcast %7 : vector<8x1xf32> to vector<8x256xf32>
    %29 = arith.addf %27, %28 : vector<8x256xf32>
    %c0_22 = arith.constant 0 : index
    %c0_23 = arith.constant 0 : index
    %c0_24 = arith.constant 0 : index
    %30 = vector.load %arg11[%c0_22, %c0_23, %c0_24] : memref<1x8x256xf32, #tpu.memory_space<vmem>>, vector<1x8x256xf32>
    %31 = vector.shape_cast %30 : vector<1x8x256xf32> to vector<8x256xf32>
    %32 = vector.shape_cast %29 : vector<8x256xf32> to vector<1x8x256xf32>
    tpu.vector_store %arg11[%c0_22, %c0_23, %c0_24], %32 {strides = array<i32>} : memref<1x8x256xf32, #tpu.memory_space<vmem>>, vector<1x8x256xf32>,
    return
  }
  func.func @transform_0(%arg0: i32, %arg1: i32) -> (i32, i32, i32) {
    %c0_i32 = arith.constant 0 : i32
    %c0_i32_0 = arith.constant 0 : i32
    return %arg0, %c0_i32, %arg1 : i32, i32, i32
  }
  func.func @transform_1(%arg0: i32, %arg1: i32) -> (i32, i32) {
    %c0_i32 = arith.constant 0 : i32
    %c0_i32_0 = arith.constant 0 : i32
    %c0_i32_1 = arith.constant 0 : i32
    return %c0_i32, %c0_i32_0 : i32, i32
  }
  func.func @transform_2(%arg0: i32, %arg1: i32) -> (i32, i32) {
    %c0_i32 = arith.constant 0 : i32
    %c0_i32_0 = arith.constant 0 : i32
    %c0_i32_1 = arith.constant 0 : i32
    return %c0_i32, %c0_i32_0 : i32, i32
  }
  func.func @transform_3(%arg0: i32, %arg1: i32) -> (i32, i32) {
    %c0_i32 = arith.constant 0 : i32
    %c0_i32_0 = arith.constant 0 : i32
    %c0_i32_1 = arith.constant 0 : i32
    return %c0_i32, %c0_i32_0 : i32, i32
  }
  func.func @transform_4(%arg0: i32, %arg1: i32) -> (i32, i32) {
    %c0_i32 = arith.constant 0 : i32
    %c0_i32_0 = arith.constant 0 : i32
    %c0_i32_1 = arith.constant 0 : i32
    return %c0_i32, %c0_i32_0 : i32, i32
  }
  func.func @transform_5(%arg0: i32, %arg1: i32) -> (i32, i32) {
    %c0_i32 = arith.constant 0 : i32
    %c0_i32_0 = arith.constant 0 : i32
    %c0_i32_1 = arith.constant 0 : i32
    return %c0_i32, %c0_i32_0 : i32, i32
  }
  func.func @transform_6(%arg0: i32, %arg1: i32) -> (i32, i32) {
    %c0_i32 = arith.constant 0 : i32
    %c0_i32_0 = arith.constant 0 : i32
    %c0_i32_1 = arith.constant 0 : i32
    return %c0_i32, %c0_i32_0 : i32, i32
  }
  func.func @transform_7(%arg0: i32, %arg1: i32) -> (i32, i32) {
    %c0_i32 = arith.constant 0 : i32
    %c0_i32_0 = arith.constant 0 : i32
    %c0_i32_1 = arith.constant 0 : i32
    return %c0_i32, %c0_i32_0 : i32, i32
  }
  func.func @transform_8(%arg0: i32, %arg1: i32) -> (i32, i32) {
    %c0_i32 = arith.constant 0 : i32
    %c0_i32_0 = arith.constant 0 : i32
    %c0_i32_1 = arith.constant 0 : i32
    return %c0_i32, %c0_i32_0 : i32, i32
  }
  func.func @transform_9(%arg0: i32, %arg1: i32) -> (i32, i32, i32) {
    %c0_i32 = arith.constant 0 : i32
    %c0_i32_0 = arith.constant 0 : i32
    return %arg0, %c0_i32, %arg1 : i32, i32, i32
  }
}

</mosaic_0001>

<llo_original>
// kernel: tpu_custom_call.1
$region0: #{tpu_custom_call.1}
  #allocation0 [shape = 'u32[]', space=smem, size = 0x4, offset = 0x4, fixed_abs, tag = 'smem constant byte address 0x4 - core index']
  #allocation1 [shape = 'u32[144,128]{1,0:T(1,128)}', space=vmem, size = 0x12000, scoped, tag = 'internal scratch']
  %s0 = inlined_call_operand.vmem [shape: f32[2,16,256], index: 0, kind: input, shape index: {}]
  %s1 = inlined_call_operand.vmem [shape: bf16[32,16], index: 1, kind: input, shape index: {}]
  %s2 = inlined_call_operand.vmem [shape: f32[32,1], index: 2, kind: input, shape index: {}]
  %s3 = inlined_call_operand.vmem [shape: f32[32,1], index: 3, kind: input, shape index: {}]
  %s4 = inlined_call_operand.vmem [shape: bf16[32,32], index: 4, kind: input, shape index: {}]
  %s5 = inlined_call_operand.vmem [shape: f32[32,1], index: 5, kind: input, shape index: {}]
  %s6 = inlined_call_operand.vmem [shape: f32[32,1], index: 6, kind: input, shape index: {}]
  %s7 = inlined_call_operand.vmem [shape: bf16[8,32], index: 7, kind: input, shape index: {}]
  %s8 = inlined_call_operand.vmem [shape: f32[8,1], index: 8, kind: input, shape index: {}]
  %s9 = inlined_call_operand.hbm [shape: f32[2,8,256], index: 9, kind: output, shape index: {}]
  %s10 = sld [smem:[#allocation0]]
  $region69: #{tpu_custom_call.1} parent=0
    _
  %s12 = ssub.s32 1, %s10
  %s13 = scalar_select 0, %s12, %s10
  $region1: #{tpu_custom_call.1} parent=0
    #allocation2 [shape = 'u8[16384]{0}', space=vmem, size = 0x4000, scoped, tag = 'output window, operand 0']
    #allocation3 [shape = 's32[2]{0}', space=sflag, size = 0x8, scoped, tag = 'scoped memory for tpu_custom_call.1']
    %14 = vsyncpa [#allocation3], 0
    %s15 = scalar_lea.sflag [#allocation3], 1
    %16 = vsyncpa %s15, 0
    loop: start=0, step=1, limit=4
    $region2: #{tpu_custom_call.1} parent=1 // loop_pre_header
      _
    $region3: #{tpu_custom_call.1} parent=1 // loop_header
      %s18 = sphi 0, %s22
      %p19 = scmp.ge.s32.totalorder %s18, 4
      %s25 = sphi 0, %s37
      %s26 = sphi 0, %s33
      %s27 = sphi 0, %s25
      %s28 = sphi 0, %s26
      %s29 = sphi 0, %s27
      %s30 = sphi 0, %s28
      %s42 = sphi 0, %s44
      %s45 = sphi 0, %s42
      %s46 = sphi 0, %s45
      %s62 = sphi 0, %s46
      %s66 = sphi 0, %s66
      %s68 = sphi 0, %s66
      %s69 = sphi 0, %s68
      %s83 = sphi 0, %s69
      %s87 = sphi 0, %s87
      %s89 = sphi 0, %s87
      %s90 = sphi 0, %s89
      %s104 = sphi 0, %s90
      %s108 = sphi 0, %s108
      %s110 = sphi 0, %s108
      %s111 = sphi 0, %s110
      %s125 = sphi 0, %s111
      %s129 = sphi 0, %s129
      %s131 = sphi 0, %s129
      %s132 = sphi 0, %s131
      %s146 = sphi 0, %s132
      %s150 = sphi 0, %s150
      %s152 = sphi 0, %s150
      %s153 = sphi 0, %s152
      %s167 = sphi 0, %s153
      %s171 = sphi 0, %s171
      %s173 = sphi 0, %s171
      %s174 = sphi 0, %s173
      %s188 = sphi 0, %s174
      %s192 = sphi 0, %s192
      %s194 = sphi 0, %s192
      %s195 = sphi 0, %s194
      %s209 = sphi 0, %s195
      %s213 = sphi 0, %s213
      %s215 = sphi 0, %s213
      %s216 = sphi 0, %s215
      %s230 = sphi 0, %s216
      %s238 = sphi 0, %s240
      %s241 = sphi 0, %s238
      %s242 = sphi 0, %s241
      %s258 = sphi 0, %s242
    $region4: #{tpu_custom_call.1} parent=1 // loop_header_branch
      %21 = sbr.rel (%p19) target = $region8
    $region5: #{tpu_custom_call.1} parent=1 // loop_body
      %s23 = ssub.s32 %s18, 1
      %s24 = ssub.s32 %s18, 2
      %s31 = sadd.s32 1, %s26
      %p32 = scmp.ge.s32.totalorder %s31, 1
      %s33 = scalar_select %p32, 0, %s31
      %s34 = sadd.s32 1, %s25
      %s35 = scalar_select %p32, %s34, %s25
      %p36 = scmp.ge.s32.totalorder %s35, 2
      %s37 = scalar_select %p36, 0, %s35
      %s38 = ssub.s32 %s25, %s37
      %s39 = ssub.s32 %s26, %s33
      %s40 = sor.u32 %s38, %s39
      %p41 = scmp.eq.s32.totalorder %s40, 0
      %s43 = sadd.s32 %s42, 1
      %s44 = scalar_select %p41, %s42, %s43
      %p47 = pneg %p41
      %p48 = scmp.eq.s32.totalorder %s18, 1
      %p49 = por %p47, %p48
      %p50 = scmp.ne.s32.totalorder %s42, %s45
      %p51 = scmp.eq.s32.totalorder %s18, 0
      %p52 = por %p50, %p51
      %p53 = scmp.ne.s32.totalorder %s42, %s45
      %p54 = scmp.eq.s32.totalorder %s23, 1
      %p55 = por %p53, %p54
      %p56 = scmp.ne.s32.totalorder %s45, %s46
      %p57 = scmp.eq.s32.totalorder %s23, 0
      %p58 = por %p56, %p57
      %p59 = scmp.ne.s32.totalorder %s45, %s46
      %p60 = scmp.eq.s32.totalorder %s24, 1
      %p61 = por %p59, %p60
      %p63 = scmp.ne.s32.totalorder %s46, %s62
      %p64 = scmp.eq.s32.totalorder %s24, 0
      %p65 = por %p63, %p64
      %s67 = sadd.s32 %s66, 1
      %p70 = scmp.eq.s32.totalorder %s18, 1
      %p71 = scmp.ne.s32.totalorder %s66, %s68
      %p72 = scmp.eq.s32.totalorder %s18, 0
      %p73 = por %p71, %p72
      %p74 = scmp.ne.s32.totalorder %s66, %s68
      %p75 = scmp.eq.s32.totalorder %s23, 1
      %p76 = por %p74, %p75
      %p77 = scmp.ne.s32.totalorder %s68, %s69
      %p78 = scmp.eq.s32.totalorder %s23, 0
      %p79 = por %p77, %p78
      %p80 = scmp.ne.s32.totalorder %s68, %s69
      %p81 = scmp.eq.s32.totalorder %s24, 1
      %p82 = por %p80, %p81
      %p84 = scmp.ne.s32.totalorder %s69, %s83
      %p85 = scmp.eq.s32.totalorder %s24, 0
      %p86 = por %p84, %p85
      %s88 = sadd.s32 %s87, 1
      %p91 = scmp.eq.s32.totalorder %s18, 1
      %p92 = scmp.ne.s32.totalorder %s87, %s89
      %p93 = scmp.eq.s32.totalorder %s18, 0
      %p94 = por %p92, %p93
      %p95 = scmp.ne.s32.totalorder %s87, %s89
      %p96 = scmp.eq.s32.totalorder %s23, 1
      %p97 = por %p95, %p96
      %p98 = scmp.ne.s32.totalorder %s89, %s90
      %p99 = scmp.eq.s32.totalorder %s23, 0
      %p100 = por %p98, %p99
      %p101 = scmp.ne.s32.totalorder %s89, %s90
      %p102 = scmp.eq.s32.totalorder %s24, 1
      %p103 = por %p101, %p102
      %p105 = scmp.ne.s32.totalorder %s90, %s104
      %p106 = scmp.eq.s32.totalorder %s24, 0
      %p107 = por %p105, %p106
      %s109 = sadd.s32 %s108, 1
      %p112 = scmp.eq.s32.totalorder %s18, 1
      %p113 = scmp.ne.s32.totalorder %s108, %s110
      %p114 = scmp.eq.s32.totalorder %s18, 0
      %p115 = por %p113, %p114
      %p116 = scmp.ne.s32.totalorder %s108, %s110
      %p117 = scmp.eq.s32.totalorder %s23, 1
      %p118 = por %p116, %p117
      %p119 = scmp.ne.s32.totalorder %s110, %s111
      %p120 = scmp.eq.s32.totalorder %s23, 0
      %p121 = por %p119, %p120
      %p122 = scmp.ne.s32.totalorder %s110, %s111
      %p123 = scmp.eq.s32.totalorder %s24, 1
      %p124 = por %p122, %p123
      %p126 = scmp.ne.s32.totalorder %s111, %s125
      %p127 = scmp.eq.s32.totalorder %s24, 0
      %p128 = por %p126, %p127
      %s130 = sadd.s32 %s129, 1
      %p133 = scmp.eq.s32.totalorder %s18, 1
      %p134 = scmp.ne.s32.totalorder %s129, %s131
      %p135 = scmp.eq.s32.totalorder %s18, 0
      %p136 = por %p134, %p135
      %p137 = scmp.ne.s32.totalorder %s129, %s131
      %p138 = scmp.eq.s32.totalorder %s23, 1
      %p139 = por %p137, %p138
      %p140 = scmp.ne.s32.totalorder %s131, %s132
      %p141 = scmp.eq.s32.totalorder %s23, 0
      %p142 = por %p140, %p141
      %p143 = scmp.ne.s32.totalorder %s131, %s132
      %p144 = scmp.eq.s32.totalorder %s24, 1
      %p145 = por %p143, %p144
      %p147 = scmp.ne.s32.totalorder %s132, %s146
      %p148 = scmp.eq.s32.totalorder %s24, 0
      %p149 = por %p147, %p148
      %s151 = sadd.s32 %s150, 1
      %p154 = scmp.eq.s32.totalorder %s18, 1
      %p155 = scmp.ne.s32.totalorder %s150, %s152
      %p156 = scmp.eq.s32.totalorder %s18, 0
      %p157 = por %p155, %p156
      %p158 = scmp.ne.s32.totalorder %s150, %s152
      %p159 = scmp.eq.s32.totalorder %s23, 1
      %p160 = por %p158, %p159
      %p161 = scmp.ne.s32.totalorder %s152, %s153
      %p162 = scmp.eq.s32.totalorder %s23, 0
      %p163 = por %p161, %p162
      %p164 = scmp.ne.s32.totalorder %s152, %s153
      %p165 = scmp.eq.s32.totalorder %s24, 1
      %p166 = por %p164, %p165
      %p168 = scmp.ne.s32.totalorder %s153, %s167
      %p169 = scmp.eq.s32.totalorder %s24, 0
      %p170 = por %p168, %p169
      %s172 = sadd.s32 %s171, 1
      %p175 = scmp.eq.s32.totalorder %s18, 1
      %p176 = scmp.ne.s32.totalorder %s171, %s173
      %p177 = scmp.eq.s32.totalorder %s18, 0
      %p178 = por %p176, %p177
      %p179 = scmp.ne.s32.totalorder %s171, %s173
      %p180 = scmp.eq.s32.totalorder %s23, 1
      %p181 = por %p179, %p180
      %p182 = scmp.ne.s32.totalorder %s173, %s174
      %p183 = scmp.eq.s32.totalorder %s23, 0
      %p184 = por %p182, %p183
      %p185 = scmp.ne.s32.totalorder %s173, %s174
      %p186 = scmp.eq.s32.totalorder %s24, 1
      %p187 = por %p185, %p186
      %p189 = scmp.ne.s32.totalorder %s174, %s188
      %p190 = scmp.eq.s32.totalorder %s24, 0
      %p191 = por %p189, %p190
      %s193 = sadd.s32 %s192, 1
      %p196 = scmp.eq.s32.totalorder %s18, 1
      %p197 = scmp.ne.s32.totalorder %s192, %s194
      %p198 = scmp.eq.s32.totalorder %s18, 0
      %p199 = por %p197, %p198
      %p200 = scmp.ne.s32.totalorder %s192, %s194
      %p201 = scmp.eq.s32.totalorder %s23, 1
      %p202 = por %p200, %p201
      %p203 = scmp.ne.s32.totalorder %s194, %s195
      %p204 = scmp.eq.s32.totalorder %s23, 0
      %p205 = por %p203, %p204
      %p206 = scmp.ne.s32.totalorder %s194, %s195
      %p207 = scmp.eq.s32.totalorder %s24, 1
      %p208 = por %p206, %p207
      %p210 = scmp.ne.s32.totalorder %s195, %s209
      %p211 = scmp.eq.s32.totalorder %s24, 0
      %p212 = por %p210, %p211
      %s214 = sadd.s32 %s213, 1
      %p217 = scmp.eq.s32.totalorder %s18, 1
      %p218 = scmp.ne.s32.totalorder %s213, %s215
      %p219 = scmp.eq.s32.totalorder %s18, 0
      %p220 = por %p218, %p219
      %p221 = scmp.ne.s32.totalorder %s213, %s215
      %p222 = scmp.eq.s32.totalorder %s23, 1
      %p223 = por %p221, %p222
      %p224 = scmp.ne.s32.totalorder %s215, %s216
      %p225 = scmp.eq.s32.totalorder %s23, 0
      %p226 = por %p224, %p225
      %p227 = scmp.ne.s32.totalorder %s215, %s216
      %p228 = scmp.eq.s32.totalorder %s24, 1
      %p229 = por %p227, %p228
      %p231 = scmp.ne.s32.totalorder %s216, %s230
      %p232 = scmp.eq.s32.totalorder %s24, 0
      %p233 = por %p231, %p232
      %s234 = ssub.s32 %s25, %s37
      %s235 = ssub.s32 %s26, %s33
      %s236 = sor.u32 %s234, %s235
      %p237 = scmp.eq.s32.totalorder %s236, 0
      %s239 = sadd.s32 %s238, 1
      %s240 = scalar_select %p237, %s238, %s239
      %p243 = pneg %p237
      %p244 = scmp.eq.s32.totalorder %s18, 1
      %p245 = por %p243, %p244
      %p246 = scmp.ne.s32.totalorder %s238, %s241
      %p247 = scmp.eq.s32.totalorder %s18, 0
      %p248 = por %p246, %p247
      %p249 = scmp.ne.s32.totalorder %s238, %s241
      %p250 = scmp.eq.s32.totalorder %s23, 1
      %p251 = por %p249, %p250
      %p252 = scmp.ne.s32.totalorder %s241, %s242
      %p253 = scmp.eq.s32.totalorder %s23, 0
      %p254 = por %p252, %p253
      %p255 = scmp.ne.s32.totalorder %s241, %s242
      %p256 = scmp.eq.s32.totalorder %s24, 1
      %p257 = por %p255, %p256
      %p259 = scmp.ne.s32.totalorder %s242, %s258
      %p260 = scmp.eq.s32.totalorder %s24, 0
      %p261 = por %p259, %p260
      %p262 = scmp.le.s32.totalorder 1, %s18
      %p263 = scmp.lt.s32.totalorder %s18, 3
      %p264 = pnand %p262, %p263
      %p265 = pneg %p264
      // Predicated region
      $region9: #{tpu_custom_call.1} parent=5 // pred_check
        _
      $region10: #{tpu_custom_call.1} parent=5 // pred_check_branch
        %267 = sbr.rel (%p264) target = $region12
      $region11: #{tpu_custom_call.1} parent=5 // pred_region
        %s268 = ssub.s32 %s18, 1
        // Predicated region
        $region13: #{tpu_custom_call.1} parent=11 // pred_check
          %p269 = pneg %p79
        $region14: #{tpu_custom_call.1} parent=11 // pred_check_branch
          %271 = sbr.rel (%p269) target = $region16
        $region15: #{tpu_custom_call.1} parent=11 // pred_region
          _
        $region16: #{tpu_custom_call.1} parent=11 // pred_fallthru
          _
        // Predicated region
        $region17: #{tpu_custom_call.1} parent=11 // pred_check
          %p272 = pneg %p100
        $region18: #{tpu_custom_call.1} parent=11 // pred_check_branch
          %274 = sbr.rel (%p272) target = $region20
        $region19: #{tpu_custom_call.1} parent=11 // pred_region
          _
        $region20: #{tpu_custom_call.1} parent=11 // pred_fallthru
          _
        // Predicated region
        $region21: #{tpu_custom_call.1} parent=11 // pred_check
          %p275 = pneg %p121
        $region22: #{tpu_custom_call.1} parent=11 // pred_check_branch
          %277 = sbr.rel (%p275) target = $region24
        $region23: #{tpu_custom_call.1} parent=11 // pred_region
          _
        $region24: #{tpu_custom_call.1} parent=11 // pred_fallthru
          _
        // Predicated region
        $region25: #{tpu_custom_call.1} parent=11 // pred_check
          %p278 = pneg %p142
        $region26: #{tpu_custom_call.1} parent=11 // pred_check_branch
          %280 = sbr.rel (%p278) target = $region28
        $region27: #{tpu_custom_call.1} parent=11 // pred_region
          _
        $region28: #{tpu_custom_call.1} parent=11 // pred_fallthru
          _
        // Predicated region
        $region29: #{tpu_custom_call.1} parent=11 // pred_check
          %p281 = pneg %p163
        $region30: #{tpu_custom_call.1} parent=11 // pred_check_branch
          %283 = sbr.rel (%p281) target = $region32
        $region31: #{tpu_custom_call.1} parent=11 // pred_region
          _
        $region32: #{tpu_custom_call.1} parent=11 // pred_fallthru
          _
        // Predicated region
        $region33: #{tpu_custom_call.1} parent=11 // pred_check
          %p284 = pneg %p184
        $region34: #{tpu_custom_call.1} parent=11 // pred_check_branch
          %286 = sbr.rel (%p284) target = $region36
        $region35: #{tpu_custom_call.1} parent=11 // pred_region
          _
        $region36: #{tpu_custom_call.1} parent=11 // pred_fallthru
          _
        // Predicated region
        $region37: #{tpu_custom_call.1} parent=11 // pred_check
          %p287 = pneg %p205
        $region38: #{tpu_custom_call.1} parent=11 // pred_check_branch
          %289 = sbr.rel (%p287) target = $region40
        $region39: #{tpu_custom_call.1} parent=11 // pred_region
          _
        $region40: #{tpu_custom_call.1} parent=11 // pred_fallthru
          _
        // Predicated region
        $region41: #{tpu_custom_call.1} parent=11 // pred_check
          %p290 = pneg %p226
        $region42: #{tpu_custom_call.1} parent=11 // pred_check_branch
          %292 = sbr.rel (%p290) target = $region44
        $region43: #{tpu_custom_call.1} parent=11 // pred_region
          _
        $region44: #{tpu_custom_call.1} parent=11 // pred_fallthru
          _
      $region12: #{tpu_custom_call.1} parent=5 // pred_fallthru
        _
      %p293 = scmp.lt.s32.totalorder %s18, 2
      // Predicated region
      $region45: #{tpu_custom_call.1} parent=5 // pred_check
        %p294 = pneg %p293
      $region46: #{tpu_custom_call.1} parent=5 // pred_check_branch
        %296 = sbr.rel (%p294) target = $region48
      $region47: #{tpu_custom_call.1} parent=5 // pred_region
        // Predicated region
        $region49: #{tpu_custom_call.1} parent=47 // pred_check
          %p297 = pneg %p52
        $region50: #{tpu_custom_call.1} parent=47 // pred_check_branch
          %299 = sbr.rel (%p297) target = $region52
        $region51: #{tpu_custom_call.1} parent=47 // pred_region
          %s300 = smul.u32 2, %s26
          %p301 = scmp.lt.s32.totalorder %s25, 1
          %s302 = scalar_select %p301, %s25, 1
          %p303 = scmp.lt.s32.totalorder %s300, 1
          %s304 = scalar_select %p303, %s300, 1
          %s305 = smul.addr %s302, 4
          %s306 = sadd.s32 %s304, %s305
          %s307 = smul.addr %s306, 8
          %s308 = scalar_lea.vmem %s0, %s307
          %s309 = smul.u32 2, %s26
        $region52: #{tpu_custom_call.1} parent=47 // pred_fallthru
          _
      $region48: #{tpu_custom_call.1} parent=5 // pred_fallthru
        _
      %p310 = scmp.le.s32.totalorder 1, %s18
      %p311 = scmp.lt.s32.totalorder %s18, 3
      %p312 = pnand %p310, %p311
      %p313 = pneg %p312
      // Predicated region
      $region53: #{tpu_custom_call.1} parent=5 // pred_check
        _
      $region54: #{tpu_custom_call.1} parent=5 // pred_check_branch
        %315 = sbr.rel (%p312) target = $region56
      $region55: #{tpu_custom_call.1} parent=5 // pred_region
        %s316 = ssub.s32 %s18, 1
        %s317 = smul.u32 2, %s28
        %p318 = scmp.lt.s32.totalorder %s27, 1
        %s319 = scalar_select %p318, %s27, 1
        %p320 = scmp.lt.s32.totalorder %s317, 1
        %s321 = scalar_select %p320, %s317, 1
        %s322 = smul.addr %s319, 4
        %s323 = sadd.s32 %s321, %s322
        %s324 = smul.addr %s323, 8
        %s325 = scalar_lea.vmem %s0, %s324
        %p326 = pneg %p58
        %p327 = pneg %p55
        %p328 = pneg %p79
        %p329 = pneg %p76
        %p330 = pneg %p100
        %p331 = pneg %p97
        %p332 = pneg %p121
        %p333 = pneg %p118
        %p334 = pneg %p142
        %p335 = pneg %p139
        %p336 = pneg %p163
        %p337 = pneg %p160
        %p338 = pneg %p184
        %p339 = pneg %p181
        %p340 = pneg %p205
        %p341 = pneg %p202
        %p342 = pneg %p226
        %p343 = pneg %p223
        %p344 = pneg %p254
        %p345 = pneg %p251
        %s346 = sand.u32 %s241, 1
        %s347 = scalar_lea.sflag [#allocation3], %s346
        %s348 = sand.u32 %s241, 1
        %s349 = smul.addr %s348, 16
        %s350 = scalar_lea.vmem [#allocation2], %s349
        %s351 = smul.u32 2, %s28
        %p352 = scmp.lt.s32.totalorder %s27, 1
        %s353 = scalar_select %p352, %s27, 1
        %p354 = scmp.lt.s32.totalorder %s351, 1
        %s355 = scalar_select %p354, %s351, 1
        %s356 = smul.addr %s353, 4
        %s357 = sadd.s32 %s355, %s356
        %s358 = smul.addr %s357, 8
        %s359 = scalar_lea.vmem %s0, %s358
        %s360 = smul.u32 2, %s28
        %s361 = smul.u32 2, %s28
        %v363 = vld [vmem:[%s1] sm:$0xf]
        %v364 = vld [vmem:[%s1 + $0x4] sm:$0xf]
        %v365 = vld [vmem:[%s1 + $0x8] sm:$0xf]
        %v366 = vld [vmem:[%s1 + $0xc] sm:$0xf]
        %v367 = vld [vmem:[%s4] sm:$0xf]
        %v368 = vld [vmem:[%s4 + $0x4] sm:$0xf]
        %v369 = vld [vmem:[%s4 + $0x8] sm:$0xf]
        %v370 = vld [vmem:[%s4 + $0xc] sm:$0xf]
        %v371 = vld [vmem:[%s7] sm:$0xf]
        %v372 = vld [vmem:[%s2] sm:$0xff]
        %v373 = vld [vmem:[%s2 + $0x8] sm:$0xff]
        %v374 = vld [vmem:[%s2 + $0x10] sm:$0xff]
        %v375 = vld [vmem:[%s2 + $0x18] sm:$0xff]
        %v376 = vld [vmem:[%s3] sm:$0xff]
        %v377 = vld [vmem:[%s3 + $0x8] sm:$0xff]
        %v378 = vld [vmem:[%s3 + $0x10] sm:$0xff]
        %v379 = vld [vmem:[%s3 + $0x18] sm:$0xff]
        %v380 = vld [vmem:[%s5] sm:$0xff]
        %v381 = vld [vmem:[%s5 + $0x8] sm:$0xff]
        %v382 = vld [vmem:[%s5 + $0x10] sm:$0xff]
        %v383 = vld [vmem:[%s5 + $0x18] sm:$0xff]
        %v384 = vld [vmem:[%s6] sm:$0xff]
        %v385 = vld [vmem:[%s6 + $0x8] sm:$0xff]
        %v386 = vld [vmem:[%s6 + $0x10] sm:$0xff]
        %v387 = vld [vmem:[%s6 + $0x18] sm:$0xff]
        %v388 = vld [vmem:[%s8] sm:$0xff]
        %v389 = vld [vmem:[%s359] sm:$0xff]
        %v390 = vld [vmem:[%s359 + $0x8] sm:$0xff]
        %v391 = vld [vmem:[%s359 + $0x10] sm:$0xff]
        %v392 = vld [vmem:[%s359 + $0x18] sm:$0xff]
        %v393 = vpack.c.bf16 %v391, %v389
        %v394 = vpack.c.bf16 %v392, %v390
        %v399 = vunpack.c.l.b16 %v363
        %v400 = vunpack.c.l.b16 %v364
        %v401 = vunpack.c.l.b16 %v365
        %v402 = vunpack.c.l.b16 %v366
        %v403 = vpack.c.b16 %v400, %v399
        %v404 = vpack.c.b16 %v402, %v401
        %vm405 = vcmask 130048
        %v407 = vsel %vm405, %v403, 0
        %v410 = vsel %vm405, %v404, 0
        %412 = vmatprep.subr.bf16.mxu0 0
        %413 = vmatpush1.bf16.msra.mxu0 0
        %414 = vmatprep.subr.bf16.mxu0 0
        %415 = vmatpush1.bf16.msra.mxu0 0
        %416 = vmatprep.subr.bf16.mxu0 0
        %417 = vmatpush1.bf16.msra.mxu0 0
        %418 = vmatprep.subr.bf16.mxu0 0
        %419 = vmatpush1.bf16.msra.mxu0 0
        %420 = vmatprep.subr.bf16.mxu0 0
        %421 = vmatpush1.bf16.msra.mxu0 0
        %422 = vmatprep.subr.bf16.mxu0 0
        %423 = vmatpush1.bf16.msra.mxu0 0
        %424 = vmatprep.subr.bf16.mxu0 0
        %425 = vmatpush1.bf16.msra.mxu0 0
        %426 = vmatprep.subr.bf16.mxu0 %v394
        %427 = vmatpush1.bf16.msra.mxu0 %v393
        %428 = vmatprep.subr.bf16.mxu0 0
        %429 = vmatpush2.bf16.msra.mxu0 0
        %430 = vmatprep.subr.bf16.mxu0 0
        %431 = vmatpush2.bf16.msra.mxu0 0
        %432 = vmatprep.subr.bf16.mxu0 0
        %433 = vmatpush2.bf16.msra.mxu0 0
        %434 = vmatprep.subr.bf16.mxu0 0
        %435 = vmatpush2.bf16.msra.mxu0 0
        %436 = vmatprep.subr.bf16.mxu0 0
        %437 = vmatpush2.bf16.msra.mxu0 0
        %438 = vmatprep.subr.bf16.mxu0 0
        %439 = vmatpush2.bf16.msra.mxu0 0
        %440 = vmatprep.subr.bf16.mxu0 0
        %441 = vmatpush2.bf16.msra.mxu0 0
        %442 = vmatprep.subr.bf16.mxu0 0
        %443 = vmatpush2.bf16.msra.mxu0 0
        %444 = vmatprep.mubr.bf16.mxu0 0
        %445 = vmatmul.mubr.bf16.gmra.mxu0 %v407
        %v446 = vpop.f32.mrf.mxu0
        %v447 = vadd.f32 0.0, %v446
        %v448 = vpop.f32.mrf.mxu0
        %v449 = vadd.f32 0.0, %v448
        %v450 = vpop.f32.mrf.mxu0
        %v451 = vadd.f32 0.0, %v450
        %v452 = vpop.f32.mrf.mxu0
        %v453 = vadd.f32 0.0, %v452
        %454 = vmatprep.mubr.bf16.mxu0 0
        %455 = vmatmul.mubr.bf16.gmra.mxu0 %v410
        %v456 = vpop.f32.mrf.mxu0
        %v457 = vadd.f32 0.0, %v456
        %v458 = vpop.f32.mrf.mxu0
        %v459 = vadd.f32 0.0, %v458
        %v460 = vpop.f32.mrf.mxu0
        %v461 = vadd.f32 0.0, %v460
        %v462 = vpop.f32.mrf.mxu0
        %v463 = vadd.f32 0.0, %v462
        %464 = vdwg.mxu0
        %466 = vset.pattern.permute.xlu0 0
        %467 = vperm.xlu0 %466, %v372
        %v468 = vpop.permute.xlu0 %467
        %471 = vset.pattern.permute.xlu0 0
        %472 = vperm.xlu0 %471, %v373
        %v473 = vpop.permute.xlu0 %472
        %476 = vset.pattern.permute.xlu0 0
        %477 = vperm.xlu0 %476, %v374
        %v478 = vpop.permute.xlu0 %477
        %481 = vset.pattern.permute.xlu0 0
        %482 = vperm.xlu0 %481, %v375
        %v483 = vpop.permute.xlu0 %482
        %v485 = vmul.f32 %v447, %v468
        %v486 = vmul.f32 %v449, %v468
        %v487 = vmul.f32 %v451, %v473
        %v488 = vmul.f32 %v453, %v473
        %v489 = vmul.f32 %v457, %v478
        %v490 = vmul.f32 %v459, %v478
        %v491 = vmul.f32 %v461, %v483
        %v492 = vmul.f32 %v463, %v483
        %494 = vset.pattern.permute.xlu0 0
        %495 = vperm.xlu0 %494, %v376
        %v496 = vpop.permute.xlu0 %495
        %499 = vset.pattern.permute.xlu0 0
        %500 = vperm.xlu0 %499, %v377
        %v501 = vpop.permute.xlu0 %500
        %504 = vset.pattern.permute.xlu0 0
        %505 = vperm.xlu0 %504, %v378
        %v506 = vpop.permute.xlu0 %505
        %509 = vset.pattern.permute.xlu0 0
        %510 = vperm.xlu0 %509, %v379
        %v511 = vpop.permute.xlu0 %510
        %v513 = vadd.f32 %v485, %v496
        %v514 = vadd.f32 %v486, %v496
        %v515 = vadd.f32 %v487, %v501
        %v516 = vadd.f32 %v488, %v501
        %v517 = vadd.f32 %v489, %v506
        %v518 = vadd.f32 %v490, %v506
        %v519 = vadd.f32 %v491, %v511
        %v520 = vadd.f32 %v492, %v511
        %v521 = vmax.f32 %v513, 0.0
        %v522 = vmax.f32 %v514, 0.0
        %v523 = vmax.f32 %v515, 0.0
        %v524 = vmax.f32 %v516, 0.0
        %v525 = vmax.f32 %v517, 0.0
        %v526 = vmax.f32 %v518, 0.0
        %v527 = vmax.f32 %v519, 0.0
        %v528 = vmax.f32 %v520, 0.0
        %v529 = vpack.c.bf16 %v523, %v521
        %v530 = vpack.c.bf16 %v524, %v522
        %v531 = vpack.c.bf16 %v527, %v525
        %v532 = vpack.c.bf16 %v528, %v526
        %v537 = vunpack.c.l.b16 %v367
        %v538 = vunpack.c.l.b16 %v368
        %v539 = vunpack.c.l.b16 %v369
        %v540 = vunpack.c.l.b16 %v370
        %v541 = vpack.c.b16 %v538, %v537
        %v542 = vpack.c.b16 %v540, %v539
        %vm543 = vcmask 261120
        %v545 = vsel %vm543, %v541, 0
        %v548 = vsel %vm543, %v542, 0
        %550 = vmatprep.subr.bf16.mxu0 0
        %551 = vmatpush1.bf16.msra.mxu0 0
        %552 = vmatprep.subr.bf16.mxu0 0
        %553 = vmatpush1.bf16.msra.mxu0 0
        %554 = vmatprep.subr.bf16.mxu0 0
        %555 = vmatpush1.bf16.msra.mxu0 0
        %556 = vmatprep.subr.bf16.mxu0 0
        %557 = vmatpush1.bf16.msra.mxu0 0
        %558 = vmatprep.subr.bf16.mxu0 0
        %559 = vmatpush1.bf16.msra.mxu0 0
        %560 = vmatprep.subr.bf16.mxu0 0
        %561 = vmatpush1.bf16.msra.mxu0 0
        %562 = vmatprep.subr.bf16.mxu0 %v532
        %563 = vmatpush1.bf16.msra.mxu0 %v531
        %564 = vmatprep.subr.bf16.mxu0 %v530
        %565 = vmatpush1.bf16.msra.mxu0 %v529
        %566 = vmatprep.subr.bf16.mxu0 0
        %567 = vmatpush2.bf16.msra.mxu0 0
        %568 = vmatprep.subr.bf16.mxu0 0
        %569 = vmatpush2.bf16.msra.mxu0 0
        %570 = vmatprep.subr.bf16.mxu0 0
        %571 = vmatpush2.bf16.msra.mxu0 0
        %572 = vmatprep.subr.bf16.mxu0 0
        %573 = vmatpush2.bf16.msra.mxu0 0
        %574 = vmatprep.subr.bf16.mxu0 0
        %575 = vmatpush2.bf16.msra.mxu0 0
        %576 = vmatprep.subr.bf16.mxu0 0
        %577 = vmatpush2.bf16.msra.mxu0 0
        %578 = vmatprep.subr.bf16.mxu0 0
        %579 = vmatpush2.bf16.msra.mxu0 0
        %580 = vmatprep.subr.bf16.mxu0 0
        %581 = vmatpush2.bf16.msra.mxu0 0
        %582 = vmatprep.mubr.bf16.mxu0 0
        %583 = vmatmul.mubr.bf16.gmra.mxu0 %v545
        %v584 = vpop.f32.mrf.mxu0
        %v585 = vadd.f32 0.0, %v584
        %v586 = vpop.f32.mrf.mxu0
        %v587 = vadd.f32 0.0, %v586
        %v588 = vpop.f32.mrf.mxu0
        %v589 = vadd.f32 0.0, %v588
        %v590 = vpop.f32.mrf.mxu0
        %v591 = vadd.f32 0.0, %v590
        %592 = vmatprep.mubr.bf16.mxu0 0
        %593 = vmatmul.mubr.bf16.gmra.mxu0 %v548
        %v594 = vpop.f32.mrf.mxu0
        %v595 = vadd.f32 0.0, %v594
        %v596 = vpop.f32.mrf.mxu0
        %v597 = vadd.f32 0.0, %v596
        %v598 = vpop.f32.mrf.mxu0
        %v599 = vadd.f32 0.0, %v598
        %v600 = vpop.f32.mrf.mxu0
        %v601 = vadd.f32 0.0, %v600
        %602 = vdwg.mxu0
        %604 = vset.pattern.permute.xlu0 0
        %605 = vperm.xlu0 %604, %v380
        %v606 = vpop.permute.xlu0 %605
        %609 = vset.pattern.permute.xlu0 0
        %610 = vperm.xlu0 %609, %v381
        %v611 = vpop.permute.xlu0 %610
        %614 = vset.pattern.permute.xlu0 0
        %615 = vperm.xlu0 %614, %v382
        %v616 = vpop.permute.xlu0 %615
        %619 = vset.pattern.permute.xlu0 0
        %620 = vperm.xlu0 %619, %v383
        %v621 = vpop.permute.xlu0 %620
        %v623 = vmul.f32 %v585, %v606
        %v624 = vmul.f32 %v587, %v606
        %v625 = vmul.f32 %v589, %v611
        %v626 = vmul.f32 %v591, %v611
        %v627 = vmul.f32 %v595, %v616
        %v628 = vmul.f32 %v597, %v616
        %v629 = vmul.f32 %v599, %v621
        %v630 = vmul.f32 %v601, %v621
        %632 = vset.pattern.permute.xlu0 0
        %633 = vperm.xlu0 %632, %v384
        %v634 = vpop.permute.xlu0 %633
        %637 = vset.pattern.permute.xlu0 0
        %638 = vperm.xlu0 %637, %v385
        %v639 = vpop.permute.xlu0 %638
        %642 = vset.pattern.permute.xlu0 0
        %643 = vperm.xlu0 %642, %v386
        %v644 = vpop.permute.xlu0 %643
        %647 = vset.pattern.permute.xlu0 0
        %648 = vperm.xlu0 %647, %v387
        %v649 = vpop.permute.xlu0 %648
        %v651 = vadd.f32 %v623, %v634
        %v652 = vadd.f32 %v624, %v634
        %v653 = vadd.f32 %v625, %v639
        %v654 = vadd.f32 %v626, %v639
        %v655 = vadd.f32 %v627, %v644
        %v656 = vadd.f32 %v628, %v644
        %v657 = vadd.f32 %v629, %v649
        %v658 = vadd.f32 %v630, %v649
        %v659 = vmax.f32 %v651, 0.0
        %v660 = vmax.f32 %v652, 0.0
        %v661 = vmax.f32 %v653, 0.0
        %v662 = vmax.f32 %v654, 0.0
        %v663 = vmax.f32 %v655, 0.0
        %v664 = vmax.f32 %v656, 0.0
        %v665 = vmax.f32 %v657, 0.0
        %v666 = vmax.f32 %v658, 0.0
        %v667 = vpack.c.bf16 %v661, %v659
        %v668 = vpack.c.bf16 %v662, %v660
        %v669 = vpack.c.bf16 %v665, %v663
        %v670 = vpack.c.bf16 %v666, %v664
        %672 = vset.pattern.permute.xlu0 0
        %673 = vperm.xlu0 %672, %v388
        %v674 = vpop.permute.xlu0 %673
        %v677 = vsel %vm543, %v371, 0
        %679 = vmatprep.subr.bf16.mxu0 0
        %680 = vmatpush1.bf16.msra.mxu0 0
        %681 = vmatprep.subr.bf16.mxu0 0
        %682 = vmatpush1.bf16.msra.mxu0 0
        %683 = vmatprep.subr.bf16.mxu0 0
        %684 = vmatpush1.bf16.msra.mxu0 0
        %685 = vmatprep.subr.bf16.mxu0 0
        %686 = vmatpush1.bf16.msra.mxu0 0
        %687 = vmatprep.subr.bf16.mxu0 0
        %688 = vmatpush1.bf16.msra.mxu0 0
        %689 = vmatprep.subr.bf16.mxu0 0
        %690 = vmatpush1.bf16.msra.mxu0 0
        %691 = vmatprep.subr.bf16.mxu0 %v670
        %692 = vmatpush1.bf16.msra.mxu0 %v669
        %693 = vmatprep.subr.bf16.mxu0 %v668
        %694 = vmatpush1.bf16.msra.mxu0 %v667
        %695 = vmatprep.subr.bf16.mxu0 0
        %696 = vmatpush2.bf16.msra.mxu0 0
        %697 = vmatprep.subr.bf16.mxu0 0
        %698 = vmatpush2.bf16.msra.mxu0 0
        %699 = vmatprep.subr.bf16.mxu0 0
        %700 = vmatpush2.bf16.msra.mxu0 0
        %701 = vmatprep.subr.bf16.mxu0 0
        %702 = vmatpush2.bf16.msra.mxu0 0
        %703 = vmatprep.subr.bf16.mxu0 0
        %704 = vmatpush2.bf16.msra.mxu0 0
        %705 = vmatprep.subr.bf16.mxu0 0
        %706 = vmatpush2.bf16.msra.mxu0 0
        %707 = vmatprep.subr.bf16.mxu0 0
        %708 = vmatpush2.bf16.msra.mxu0 0
        %709 = vmatprep.subr.bf16.mxu0 0
        %710 = vmatpush2.bf16.msra.mxu0 0
        %711 = vmatprep.mubr.bf16.mxu0 0
        %712 = vmatmul.mubr.bf16.gmra.mxu0 %v677
        %v713 = vpop.f32.mrf.mxu0
        %v714 = vadd.f32 %v674, %v713
        %v715 = vpop.f32.mrf.mxu0
        %v716 = vadd.f32 %v674, %v715
        %v717 = vpop.f32.mrf.mxu0
        %v718 = vpop.f32.mrf.mxu0
        %719 = vdwg.mxu0
        %720 = vst [vmem:[%s350] sm:$0xff] %v714
        %721 = vst [vmem:[%s350 + $0x8] sm:$0xff] %v716
        %s722 = sand.u32 %s241, 1
        %s723 = scalar_lea.sflag [#allocation3], %s722
        %s724 = sand.u32 %s241, 1
        %s725 = smul.addr %s724, 16
        %s726 = scalar_lea.vmem [#allocation2], %s725
        // Predicated region
        $region57: #{tpu_custom_call.1} parent=55 // pred_check
          %p727 = pneg %p251
        $region58: #{tpu_custom_call.1} parent=55 // pred_check_branch
          %729 = sbr.rel (%p727) target = $region60
        $region59: #{tpu_custom_call.1} parent=55 // pred_region
          %s730 = smul.u32 2, %s28
          %s732 = ssub.s32 256, 256
          %733 = vsyncadd %s723, %s732
          %s734 = smul.addr %s27, 2
          %s735 = sadd.s32 %s730, %s734
          %s736 = smul.addr %s735, 128
          %s737 = scalar_lea.hbm %s9, %s736
          %s739 = sshll.u32 %s726, 4
          %s740 = int_to_ptr.vmem [resolvable:$true] %s739
          %742 = dma.vmem_to_hbm [thread:$0]  %s740, 256, %s737, %s723
        $region60: #{tpu_custom_call.1} parent=55 // pred_fallthru
          _
      $region56: #{tpu_custom_call.1} parent=5 // pred_fallthru
        _
      %p743 = scmp.le.s32.totalorder 2, %s18
      // Predicated region
      $region61: #{tpu_custom_call.1} parent=5 // pred_check
        %p744 = pneg %p743
      $region62: #{tpu_custom_call.1} parent=5 // pred_check_branch
        %746 = sbr.rel (%p744) target = $region64
      $region63: #{tpu_custom_call.1} parent=5 // pred_region
        %s747 = ssub.s32 %s18, 2
        // Predicated region
        $region65: #{tpu_custom_call.1} parent=63 // pred_check
          %p748 = pneg %p257
        $region66: #{tpu_custom_call.1} parent=63 // pred_check_branch
          %750 = sbr.rel (%p748) target = $region68
        $region67: #{tpu_custom_call.1} parent=63 // pred_region
          %s751 = sand.u32 %s242, 1
          %s752 = scalar_lea.sflag [#allocation3], %s751
          %s753 = sand.u32 %s242, 1
          %s754 = smul.addr %s753, 16
          %s755 = scalar_lea.vmem [#allocation2], %s754
          %756 = dma.done %s752, 256
        $region68: #{tpu_custom_call.1} parent=63 // pred_fallthru
          _
      $region64: #{tpu_custom_call.1} parent=5 // pred_fallthru
        _
    $region6: #{tpu_custom_call.1} parent=1 // loop_footer
      %s22 = sadd.s32 1, %s18
    $region7: #{tpu_custom_call.1} parent=1 // loop_footer_branch
      %17 = sbr.rel target = $region3
    $region8: #{tpu_custom_call.1} parent=1 // loop_exit
      _
    %757 = vsyncpa [#allocation3], 1
    %s758 = scalar_lea.sflag [#allocation3], 1
    %759 = vsyncpa %s758, 1

</llo_original>
